<compile_context>
chip_gen: v5e
topology: v5e:2x2
jax: 0.10.0
libtpu: 0.0.40
codegen_flags: <defaults>
</compile_context>

<pallas_src>
import jax
import jax.numpy as jnp
from jax.experimental import pallas as pl
from jax.experimental.pallas import tpu as pltpu


def _fc_kernel(x_ref, w_ref, b_ref, o_ref):
    # x_ref: (TM, K)  rows of the flattened input (current batch tile)
    # w_ref: (d, K)   torch-layout weight, resident in VMEM across grid steps
    # b_ref: (d, 1)   bias, resident in VMEM across grid steps
    # o_ref: (d, TM)  transposed output tile (batch on the 128-lane axis)
    acc = jax.lax.dot_general(
        w_ref[...], x_ref[...],
        dimension_numbers=(((1,), (1,)), ((), ())),   # w @ x^T on the MXU
        preferred_element_type=jnp.float32)
    o_ref[...] = (acc + b_ref[...].astype(jnp.float32)).astype(o_ref.dtype)


def fn_net_forward(x, w, b, *, in_x=3, in_y=5, tm_max=8192):
    """FN_net forward.

    x: anything reshapeable to (-1, in_x*in_y)  (e.g. (B, in_x, in_y))
    w: (d, in_x*in_y)  -- torch nn.Linear weight layout
    b: (d,)            -- torch nn.Linear bias
    returns: (B, d)
    """
    assert tm_max % 128 == 0, "tm_max must be a multiple of 128 (lane width)"
    K = in_x * in_y
    d = w.shape[0]
    x2d = x.reshape(-1, K)
    B = x2d.shape[0]

    # Batch tile.  If B < tm_max use a single block equal to the full batch
    # (block dim == array dim is always legal); otherwise tile by tm_max and
    # let Pallas mask the partial last block.
    tm = tm_max if B >= tm_max else B
    grid = pl.cdiv(B, tm)

    b2d = b.reshape(d, 1)

    out_t = pl.pallas_call(
        _fc_kernel,
        out_shape=jax.ShapeDtypeStruct((d, B), x2d.dtype),
        grid_spec=pltpu.PrefetchScalarGridSpec(
            num_scalar_prefetch=0,
            grid=(grid,),
            in_specs=[
                pl.BlockSpec((tm, K), lambda i: (i, 0)),   # batch tile
                pl.BlockSpec((d, K), lambda i: (0, 0)),    # resident weight
                pl.BlockSpec((d, 1), lambda i: (0, 0)),    # resident bias
            ],
            out_specs=pl.BlockSpec((d, tm), lambda i: (0, i)),
        ),
        compiler_params=pltpu.CompilerParams(
            dimension_semantics=("parallel",)),   # v7x: tiles split across TCs
    )(x2d, w, b2d)

    # (d, B) -> (B, d); for d=1 this is a free relayout.
    return out_t.T


def init_params(key, in_x=3, in_y=5, d=1, dtype=jnp.float32):
    """Deterministic init mimicking torch.nn.Linear default U(+-1/sqrt(fan_in))."""
    K = in_x * in_y
    kw, kb = jax.random.split(key)
    bound = 1.0 / jnp.sqrt(jnp.array(K, dtype))
    w = jax.random.uniform(kw, (d, K), dtype, minval=-bound, maxval=bound)
    b = jax.random.uniform(kb, (d,), dtype, minval=-bound, maxval=bound)
    return w, b


if __name__ == "__main__":
    in_x, in_y, d = 3, 5, 1
    key = jax.random.PRNGKey(0)
    kx, kp, kx2 = jax.random.split(key, 3)

    w, b = init_params(kp, in_x=in_x, in_y=in_y, d=d)

    # Small case matching the PyTorch module's typical call: (B, in_x, in_y)
    x = jax.random.normal(kx, (2, in_x, in_y), jnp.float32)
    out = jax.block_until_ready(fn_net_forward(x, w, b, in_x=in_x, in_y=in_y))
    ref = x.reshape(-1, in_x * in_y) @ w.T + b[None, :]
    assert out.shape == (2, d), out.shape
    assert jnp.allclose(out, ref, atol=1e-5, rtol=1e-5)

    # Also exercise the multi-tile path with a ragged batch (partial last
    # block handled by Pallas boundary masking).
    x2 = jax.random.normal(kx2, (261, in_x, in_y), jnp.float32)
    out2 = jax.block_until_ready(
        fn_net_forward(x2, w, b, in_x=in_x, in_y=in_y, tm_max=128))
    ref2 = x2.reshape(-1, in_x * in_y) @ w.T + b[None, :]
    assert out2.shape == (261, d), out2.shape
    assert jnp.allclose(out2, ref2, atol=1e-5, rtol=1e-5)

    print("KERNEL_OK")
</pallas_src>

<mosaic_0001>
module attributes {stable_mosaic.version = 11 : i64} {
  func.func @_fc_kernel(%arg0: i32, %arg1: memref<2x15xf32, #tpu.memory_space<vmem>>, %arg2: memref<1x15xf32, #tpu.memory_space<vmem>>, %arg3: memref<1x1xf32, #tpu.memory_space<vmem>>, %arg4: memref<1x2xf32, #tpu.memory_space<vmem>>) attributes {dimension_semantics = [#tpu.dimension_semantics<parallel>], iteration_bounds = array<i64: 1>, scalar_prefetch = 0 : i64, scratch_operands = 0 : i64, tpu.core_type = #tpu.core_type<tc>, window_params = [{transform_indices = @transform_0, window_bounds = array<i64: 2, 15>}, {pipeline_mode = #tpu.pipeline_mode<synchronous>, transform_indices = @transform_1, window_bounds = array<i64: 1, 15>}, {pipeline_mode = #tpu.pipeline_mode<synchronous>, transform_indices = @transform_2, window_bounds = array<i64: 1, 1>}, {transform_indices = @transform_3, window_bounds = array<i64: 1, 2>}]} {
    %c0 = arith.constant 0 : index
    %c0_0 = arith.constant 0 : index
    %0 = vector.load %arg2[%c0, %c0_0] : memref<1x15xf32, #tpu.memory_space<vmem>>, vector<1x15xf32>
    %c0_1 = arith.constant 0 : index
    %c0_2 = arith.constant 0 : index
    %1 = vector.load %arg1[%c0_1, %c0_2] : memref<2x15xf32, #tpu.memory_space<vmem>>, vector<2x15xf32>
    %cst = arith.constant dense<0.000000e+00> : vector<1x2xf32>
    %2 = tpu.matmul %0, %1, %cst {dimension_numbers = #tpu.dot_dimension_numbers<[1], [1], [0], [0], [0, 0, 1, 0], [], []>} : vector<1x15xf32>, vector<2x15xf32>, vector<1x2xf32> -> vector<1x2xf32>
    %c0_3 = arith.constant 0 : index
    %c0_4 = arith.constant 0 : index
    %3 = vector.load %arg3[%c0_3, %c0_4] : memref<1x1xf32, #tpu.memory_space<vmem>>, vector<1x1xf32>
    %4 = vector.broadcast %3 : vector<1x1xf32> to vector<1x2xf32>
    %5 = arith.addf %2, %4 : vector<1x2xf32>
    %c0_5 = arith.constant 0 : index
    %c0_6 = arith.constant 0 : index
    %6 = vector.load %arg4[%c0_5, %c0_6] : memref<1x2xf32, #tpu.memory_space<vmem>>, vector<1x2xf32>
    tpu.vector_store %arg4[%c0_5, %c0_6], %5 {strides = array<i32>} : memref<1x2xf32, #tpu.memory_space<vmem>>, vector<1x2xf32>,
    return
  }
  func.func @transform_0(%arg0: i32) -> (i32, i32) {
    %c0_i32 = arith.constant 0 : i32
    %c0_i32_0 = arith.constant 0 : i32
    return %arg0, %c0_i32 : i32, i32
  }
  func.func @transform_1(%arg0: i32) -> (i32, i32) {
    %c0_i32 = arith.constant 0 : i32
    %c0_i32_0 = arith.constant 0 : i32
    %c0_i32_1 = arith.constant 0 : i32
    return %c0_i32, %c0_i32_0 : i32, i32
  }
  func.func @transform_2(%arg0: i32) -> (i32, i32) {
    %c0_i32 = arith.constant 0 : i32
    %c0_i32_0 = arith.constant 0 : i32
    %c0_i32_1 = arith.constant 0 : i32
    return %c0_i32, %c0_i32_0 : i32, i32
  }
  func.func @transform_3(%arg0: i32) -> (i32, i32) {
    %c0_i32 = arith.constant 0 : i32
    %c0_i32_0 = arith.constant 0 : i32
    return %c0_i32, %arg0 : i32, i32
  }
}

</mosaic_0001>

<llo_original>
// kernel: tpu_custom_call.1
$region0: #{tpu_custom_call.1}
  #allocation0 [shape = 'u32[]', space=smem, size = 0x4, offset = 0x4, fixed_abs, tag = 'smem constant byte address 0x4 - core index']
  #allocation1 [shape = 'u32[72,128]{1,0:T(1,128)}', space=vmem, size = 0x9000, scoped, tag = 'internal scratch']
  #allocation2 [shape = 'f32[1,1]{1,0:T(1,128)S(1)}', space=vmem, size = 0x200, scoped, tag = 'scoped memory for tpu_custom_call.1']
  %s0 = inlined_call_operand.vmem [shape: f32[2,15], index: 0, kind: input, shape index: {}]
  %s1 = inlined_call_operand.hbm [shape: f32[1,15], index: 1, kind: input, shape index: {}]
  %s2 = inlined_call_operand.<no memory space> [shape: f32[1,1], index: 2, kind: input, shape index: {}]
  %s3 = inlined_call_operand.hbm [shape: f32[1,2], index: 3, kind: output, shape index: {}]
  %s4 = sld [smem:[#allocation0]]
  $region26: #{tpu_custom_call.1} parent=0
    _
  %s6 = ssub.s32 1, %s4
  %s7 = scalar_select 0, %s6, %s4
  %v8 = vstv %s2
  %9 = vst [vmem:[#allocation2] sm:$0x1] %v8
  $region1: #{tpu_custom_call.1} parent=0
    #allocation3 [shape = 'u8[512]{0}', space=vmem, size = 0x400, scoped, tag = 'input window, operand 1, single buffered']
    #allocation4 [shape = 's32[1]{0}', space=sflag, size = 0x4, scoped, tag = 'scoped memory for tpu_custom_call.1']
    #allocation5 [shape = 's32[1]{0}', space=sflag, size = 0x4, scoped, tag = 'scoped memory for tpu_custom_call.1']
    #allocation6 [shape = 'u8[512]{0}', space=vmem, size = 0x400, scoped, tag = 'output window, operand 0, single buffered']
    %10 = vsyncpa [#allocation4], 0
    %11 = vsyncpa [#allocation5], 0
    // Predicated region
    $region2: #{tpu_custom_call.1} parent=1 // pred_check
      _
    $region3: #{tpu_custom_call.1} parent=1 // pred_check_branch
      %13 = sbr.rel (0) target = $region5
    $region4: #{tpu_custom_call.1} parent=1 // pred_region
      _
    $region5: #{tpu_custom_call.1} parent=1 // pred_fallthru
      _
    // Predicated region
    $region6: #{tpu_custom_call.1} parent=1 // pred_check
      _
    $region7: #{tpu_custom_call.1} parent=1 // pred_check_branch
      %15 = sbr.rel (0) target = $region9
    $region8: #{tpu_custom_call.1} parent=1 // pred_region
      %17 = vsyncadd [#allocation4], 0
      %s19 = sshll.u32 %s1, 4
      %s20 = int_to_ptr.hbm [resolvable:$true] %s19
      %s21 = sshll.u32 [#allocation3], 4
      %s22 = int_to_ptr.vmem [resolvable:$true] %s21
      %24 = dma.hbm_to_vmem [thread:$0]  %s20, 16, %s22, [#allocation4]
    $region9: #{tpu_custom_call.1} parent=1 // pred_fallthru
      _
    // Predicated region
    $region10: #{tpu_custom_call.1} parent=1 // pred_check
      _
    $region11: #{tpu_custom_call.1} parent=1 // pred_check_branch
      %26 = sbr.rel (0) target = $region13
    $region12: #{tpu_custom_call.1} parent=1 // pred_region
      _
    $region13: #{tpu_custom_call.1} parent=1 // pred_fallthru
      _
    // Predicated region
    $region14: #{tpu_custom_call.1} parent=1 // pred_check
      _
    $region15: #{tpu_custom_call.1} parent=1 // pred_check_branch
      %28 = sbr.rel (0) target = $region17
    $region16: #{tpu_custom_call.1} parent=1 // pred_region
      %30 = dma.done [#allocation4], 16
    $region17: #{tpu_custom_call.1} parent=1 // pred_fallthru
      _
    %v31 = vld [vmem:[#allocation3] sm:$0x1]
    %v32 = vld [vmem:[%s0] sm:$0x3]
    %v33 = vld [vmem:[#allocation2] sm:$0x1]
    %35 = vset.pattern.permute.xlu0 0
    %36 = vperm.xlu0 %35, %v33
    %v37 = vpop.permute.xlu0 %36
    %v39 = vperm.slane %v37, 0
    %vm40 = vcmask 121856
    %v42 = vsel %vm40, %v31, 0
    %v45 = vsel %vm40, %v32, 0
    %47 = vmatpush.xpose.msra.mxu0 0.0
    %48 = vmatpush.xpose.msra.mxu0 0.0
    %49 = vmatpush.xpose.msra.mxu0 0.0
    %50 = vmatpush.xpose.msra.mxu0 0.0
    %51 = vmatpush.xpose.msra.mxu0 0.0
    %52 = vmatpush.xpose.msra.mxu0 0.0
    %53 = vmatpush.xpose.msra.mxu0 0.0
    %54 = vmatpush.xpose.msra.mxu0 0.0
    %55 = vmatpush.xpose.msra.mxu0 0.0
    %56 = vmatpush.xpose.msra.mxu0 0.0
    %57 = vmatpush.xpose.msra.mxu0 0.0
    %58 = vmatpush.xpose.msra.mxu0 0.0
    %59 = vmatpush.xpose.msra.mxu0 0.0
    %60 = vmatpush.xpose.msra.mxu0 0.0
    %61 = vmatpush.xpose.msra.mxu0 0.0
    %62 = vmatpush.xpose.msra.mxu0 %v45
    %63 = vmatmul.f32.gmra.mxu0 %v42
    %v64 = vpop.f32.mrf.mxu0
    %v65 = vadd.f32 %v39, %v64
    %66 = vdwg.mxu0
    %vm67 = vcmask 8192
    %68 = vst.msk [vmem:[#allocation6] sm:$0x1] %vm67, %v65
    // Predicated region
    $region18: #{tpu_custom_call.1} parent=1 // pred_check
      _
    $region19: #{tpu_custom_call.1} parent=1 // pred_check_branch
      %70 = sbr.rel (0) target = $region21
    $region20: #{tpu_custom_call.1} parent=1 // pred_region
      %72 = vsyncadd [#allocation5], 0
      %s74 = sshll.u32 [#allocation6], 4
      %s75 = int_to_ptr.vmem [resolvable:$true] %s74
      %s76 = sshll.u32 %s3, 4
      %s77 = int_to_ptr.hbm [resolvable:$true] %s76
      %79 = dma.vmem_to_hbm [thread:$0]  %s75, 16, %s77, [#allocation5]
    $region21: #{tpu_custom_call.1} parent=1 // pred_fallthru
      _
    // Predicated region
    $region22: #{tpu_custom_call.1} parent=1 // pred_check
      _
    $region23: #{tpu_custom_call.1} parent=1 // pred_check_branch
      %81 = sbr.rel (0) target = $region25
    $region24: #{tpu_custom_call.1} parent=1 // pred_region
      %83 = dma.done [#allocation5], 16
    $region25: #{tpu_custom_call.1} parent=1 // pred_fallthru
      _
    %84 = vsyncpa [#allocation4], 1
    %85 = vsyncpa [#allocation5], 1

</llo_original>
